<compile_context>
chip_gen: v5e
topology: v5e:2x2
jax: 0.10.0
libtpu: 0.0.40
codegen_flags: <defaults>
</compile_context>

<pallas_src>
import functools

import jax
import jax.numpy as jnp
from jax.experimental import pallas as pl
from jax.experimental.pallas import tpu as pltpu


_LANE = 128
_MAX_TN = 4096  # cap on lane-dim tile width (one f32 row-strip <= 2 MiB)


def _sublane_pack(dtype) -> int:
    """Dtype-native sublane packing: 8 rows for 4B, 16 for 2B, 32 for 1B."""
    itemsize = jnp.dtype(dtype).itemsize
    return max(8, 32 // max(1, itemsize))


def _vmem_budgets():
    """(per-buffer tile budget, requested vmem limit) for this TPU generation."""
    vmem_cap = None
    try:
        info = pltpu.get_tpu_info()
        vmem_cap = getattr(info, "vmem_capacity_bytes", None)
    except Exception:
        vmem_cap = None  # unknown backend -> stay conservative (v7x-safe)
    if vmem_cap is not None and vmem_cap >= (100 << 20):
        # v5e / v6e: 128 MiB physical VMEM -> bigger tiles, fewer grid steps.
        return 8 << 20, 64 << 20
    # v7x (64 MiB physical VMEM) or unknown.
    return 6 << 20, 48 << 20


def _choose_tiles(M, N_pad, dtype):
    """Pick the largest VMEM-friendly (tm, tn) tile for an (M, N_pad) array."""
    itemsize = jnp.dtype(dtype).itemsize
    pack = _sublane_pack(dtype)
    tile_budget, vmem_limit = _vmem_budgets()

    # Lane (last) dim: lane-dense multiple of 128, capped.
    tn = min(N_pad, _MAX_TN)

    # Sublane (second-last) dim: biggest row count fitting the per-buffer budget.
    rows = max(pack, tile_budget // (tn * itemsize))
    if rows >= M:
        tm = M  # full-extent block (allowed even if M is not a multiple of 8)
    else:
        tm = max(pack, (rows // pack) * pack)
        # Prefer a tm that divides M evenly -> no masked remainder block.
        for cand in range(tm, pack - 1, -pack):
            if M % cand == 0:
                tm = cand
                break

    # v7x has 2 TensorCores: expose >= 2 parallel blocks on real workloads
    # instead of collapsing to a (1, 1) grid.  Small test inputs unaffected.
    if tm == M and tn == N_pad and M >= 2 * pack and M * tn * itemsize > (1 << 20):
        tm = max(pack, ((M // 2) // pack) * pack)

    # Hard guard: double-buffered in+out data tiles plus the noise strip must
    # fit the requested vmem limit (with headroom for Mosaic scratch).
    def _tile_bytes(tm_):
        return 4 * tm_ * tn * itemsize + 2 * tn * itemsize

    headroom = 4 << 20
    while tm > pack and _tile_bytes(tm) > vmem_limit - headroom:
        tm = max(pack, ((tm // 2) // pack) * pack)

    return tm, tn, vmem_limit


def _add_row_noise_kernel(x_ref, noise_ref, o_ref):
    # x_ref/o_ref: (tm, tn) data tile; noise_ref: (1, tn) strip, resident
    # across the inner grid axis (its block index only depends on j).
    # HBM-bandwidth-bound: the sublane broadcast add is fully hidden under DMA.
    o_ref[...] = x_ref[...] + noise_ref[...]


def add_row_noise(x2d, noise_row):
    """x2d: (M, N), noise_row: (N,) -> x2d + noise_row[None, :].

    Tiled, in-place (aliased) Pallas broadcast-add.  N is padded to a multiple
    of 128 so stores stay unmasked; the pad is sliced off afterwards.
    """
    M, N = x2d.shape

    N_pad = ((N + _LANE - 1) // _LANE) * _LANE
    if N_pad != N:
        x_in = jnp.pad(x2d, ((0, 0), (0, N_pad - N)))
        noise_in = jnp.pad(noise_row, (0, N_pad - N))
    else:
        x_in = x2d
        noise_in = noise_row
    noise_2d = noise_in.reshape(1, N_pad)

    tm, tn, vmem_limit = _choose_tiles(M, N_pad, x2d.dtype)
    n_i = pl.cdiv(M, tm)
    n_j = pl.cdiv(N_pad, tn)

    out = pl.pallas_call(
        _add_row_noise_kernel,
        out_shape=jax.ShapeDtypeStruct((M, N_pad), x2d.dtype),
        grid_spec=pltpu.PrefetchScalarGridSpec(
            num_scalar_prefetch=0,
            # j is the OUTER axis: the noise strip's block index (0, j) is
            # constant across the whole inner i sweep -> fetched n_j times
            # total, not once per grid step.
            grid=(n_j, n_i),
            in_specs=[
                pl.BlockSpec((tm, tn), lambda j, i: (i, j)),   # data tile
                pl.BlockSpec((1, tn), lambda j, i: (0, j)),    # noise strip
            ],
            out_specs=pl.BlockSpec((tm, tn), lambda j, i: (i, j)),
        ),
        input_output_aliases={0: 0},  # x += noise, write in place
        compiler_params=pltpu.CompilerParams(
            dimension_semantics=("parallel", "parallel"),
            vmem_limit_bytes=vmem_limit,
        ),
    )(x_in, noise_2d)

    if N_pad != N:
        out = out[:, :N]
    return out


@functools.partial(jax.jit, static_argnames=("p", "scale"))
def rand_noise_forward(csi, key, *, p, scale):
    """JAX/Pallas equivalent of RandNoise.forward.

    csi: array whose squeeze() is 2D, e.g. shape (1, M, N).
    key: PRNG key replacing Python random / np.random.
    Returns shape (1, M, N).  The host-side coin flip becomes a lax.cond: on
    the skip branch the kernel does not run at all (zero HBM traffic),
    matching `if random.random() > p: return csi`.
    """
    coin_key, noise_key = jax.random.split(key)

    dat = jnp.squeeze(csi)
    if dat.ndim != 2:
        raise ValueError("RandNoise expects csi.squeeze() to be 2D")
    M, N = dat.shape

    def _apply(d):
        noise = scale * jax.random.normal(noise_key, (N,), dtype=d.dtype)
        return add_row_noise(d, noise)

    if p >= 1.0:          # noise always applied (coin in [0,1) <= p)
        out2d = _apply(dat)
    elif p <= 0.0:        # noise never applied
        out2d = dat
    else:
        coin = jax.random.uniform(coin_key, ())
        out2d = jax.lax.cond(coin <= p, _apply, lambda d: d, dat)

    return out2d.reshape(1, M, N)


def _reference(csi, key, *, p, scale):
    """Pure-JAX reference with identical RNG usage and branch semantics."""
    coin_key, noise_key = jax.random.split(key)
    dat = jnp.squeeze(csi)
    M, N = dat.shape
    coin = float(jax.random.uniform(coin_key, ()))
    skip = (p <= 0.0) or (p < 1.0 and coin > p)
    if skip:
        return jnp.reshape(dat, (1, M, N))
    noise = scale * jax.random.normal(noise_key, (N,), dtype=dat.dtype)
    return jnp.reshape(dat + noise[None, :], (1, M, N))


if __name__ == "__main__":
    key = jax.random.PRNGKey(0)
    k_in, k_fwd = jax.random.split(key)

    # Small shapes consistent with the module: csi of shape (1, M, N).
    M, N = 16, 128
    csi = jax.random.normal(k_in, (1, M, N), dtype=jnp.float32)

    # 1) noise branch always taken (p = 1.0)
    out = jax.block_until_ready(rand_noise_forward(csi, k_fwd, p=1.0, scale=0.1))
    ref = _reference(csi, k_fwd, p=1.0, scale=0.1)
    assert out.shape == (1, M, N)
    assert jnp.allclose(out, ref, atol=1e-6), "mismatch vs reference (noise branch)"

    # 2) skip branch (p = 0.0): output must equal the input (kernel never runs)
    out_skip = jax.block_until_ready(rand_noise_forward(csi, k_fwd, p=0.0, scale=0.1))
    assert jnp.allclose(out_skip, csi, atol=1e-6), "skip branch changed the input"

    # 3) fractional p: lax.cond path, same coin decision as the reference
    out_half = jax.block_until_ready(rand_noise_forward(csi, k_fwd, p=0.5, scale=0.1))
    ref_half = _reference(csi, k_fwd, p=0.5, scale=0.1)
    assert jnp.allclose(out_half, ref_half, atol=1e-6), "mismatch vs reference (p=0.5)"

    # 4) ragged N (not a multiple of 128): exercises the pad + slice path
    M2, N2 = 12, 96
    csi2 = jax.random.normal(k_in, (1, M2, N2), dtype=jnp.float32)
    out2 = jax.block_until_ready(rand_noise_forward(csi2, k_fwd, p=1.0, scale=0.1))
    ref2 = _reference(csi2, k_fwd, p=1.0, scale=0.1)
    assert out2.shape == (1, M2, N2)
    assert jnp.allclose(out2, ref2, atol=1e-6), "mismatch vs reference (ragged N)"

    print("KERNEL_OK")
</pallas_src>

<mosaic_0001>
module attributes {stable_mosaic.version = 11 : i64} {
  func.func @_add_row_noise_kernel(%arg0: i32, %arg1: i32, %arg2: memref<16x128xf32, #tpu.memory_space<vmem>>, %arg3: memref<1x128xf32, #tpu.memory_space<vmem>>, %arg4: memref<16x128xf32, #tpu.memory_space<vmem>>) attributes {dimension_semantics = [#tpu.dimension_semantics<parallel>, #tpu.dimension_semantics<parallel>], iteration_bounds = array<i64: 1, 1>, scalar_prefetch = 0 : i64, scratch_operands = 0 : i64, tpu.core_type = #tpu.core_type<tc>, window_params = [{transform_indices = @transform_0, window_bounds = array<i64: 16, 128>}, {transform_indices = @transform_1, window_bounds = array<i64: 1, 128>}, {transform_indices = @transform_2, window_bounds = array<i64: 16, 128>}]} {
    %c0 = arith.constant 0 : index
    %c0_0 = arith.constant 0 : index
    %0 = vector.load %arg2[%c0, %c0_0] : memref<16x128xf32, #tpu.memory_space<vmem>>, vector<16x128xf32>
    %c0_1 = arith.constant 0 : index
    %c0_2 = arith.constant 0 : index
    %1 = vector.load %arg3[%c0_1, %c0_2] : memref<1x128xf32, #tpu.memory_space<vmem>>, vector<1x128xf32>
    %2 = vector.broadcast %1 : vector<1x128xf32> to vector<16x128xf32>
    %3 = arith.addf %0, %2 : vector<16x128xf32>
    %c0_3 = arith.constant 0 : index
    %c0_4 = arith.constant 0 : index
    %4 = vector.load %arg4[%c0_3, %c0_4] : memref<16x128xf32, #tpu.memory_space<vmem>>, vector<16x128xf32>
    tpu.vector_store %arg4[%c0_3, %c0_4], %3 {strides = array<i32>} : memref<16x128xf32, #tpu.memory_space<vmem>>, vector<16x128xf32>,
    return
  }
  func.func @transform_0(%arg0: i32, %arg1: i32) -> (i32, i32) {
    %c0_i32 = arith.constant 0 : i32
    return %arg1, %arg0 : i32, i32
  }
  func.func @transform_1(%arg0: i32, %arg1: i32) -> (i32, i32) {
    %c0_i32 = arith.constant 0 : i32
    %c0_i32_0 = arith.constant 0 : i32
    return %c0_i32, %arg0 : i32, i32
  }
  func.func @transform_2(%arg0: i32, %arg1: i32) -> (i32, i32) {
    %c0_i32 = arith.constant 0 : i32
    return %arg1, %arg0 : i32, i32
  }
}

</mosaic_0001>

<llo_original>
// kernel: rand_noise_forward.3
$region0: #{rand_noise_forward.3}
  #allocation0 [shape = 'u32[]', space=smem, size = 0x4, offset = 0x4, fixed_abs, tag = 'smem constant byte address 0x4 - core index']
  #allocation1 [shape = 'u32[72,128]{1,0:T(1,128)}', space=vmem, size = 0x9000, scoped, tag = 'internal scratch']
  %s0 = inlined_call_operand.vmem [shape: f32[16,128], index: 0, kind: input, shape index: {}, may-alias: {0,2}]
  %s1 = inlined_call_operand.vmem [shape: f32[1,128], index: 1, kind: input, shape index: {}]
  %s2 = inlined_call_operand.vmem [shape: f32[16,128], index: 2, kind: output, shape index: {}, may-alias: {0,2}]
  %s3 = sld [smem:[#allocation0]]
  $region18: #{rand_noise_forward.3} parent=0
    _
  %s5 = ssub.s32 1, %s3
  %s6 = scalar_select 0, %s5, %s3
  // Predicated region
  $region2: #{rand_noise_forward.3} parent=0 // pred_check
    _
  $region3: #{rand_noise_forward.3} parent=0 // pred_check_branch
    %8 = sbr.rel (0) target = $region5
  $region4: #{rand_noise_forward.3} parent=0 // pred_region
    _
  $region5: #{rand_noise_forward.3} parent=0 // pred_fallthru
    _
  // Predicated region
  $region6: #{rand_noise_forward.3} parent=0 // pred_check
    _
  $region7: #{rand_noise_forward.3} parent=0 // pred_check_branch
    %10 = sbr.rel (0) target = $region9
  $region8: #{rand_noise_forward.3} parent=0 // pred_region
    _
  $region9: #{rand_noise_forward.3} parent=0 // pred_fallthru
    _
  %v11 = vld [vmem:[%s0] sm:$0xff]
  %v12 = vld [vmem:[%s0 + $0x8] sm:$0xff]
  %v13 = vld [vmem:[%s1] sm:$0x1]
  %v15 = vperm.slane %v13, 0
  %v17 = vadd.f32 %v11, %v15
  %v18 = vadd.f32 %v12, %v15
  %19 = vst [vmem:[%s2] sm:$0xff] %v17
  %20 = vst [vmem:[%s2 + $0x8] sm:$0xff] %v18
  // Predicated region
  $region10: #{rand_noise_forward.3} parent=0 // pred_check
    _
  $region11: #{rand_noise_forward.3} parent=0 // pred_check_branch
    %22 = sbr.rel (0) target = $region13
  $region12: #{rand_noise_forward.3} parent=0 // pred_region
    _
  $region13: #{rand_noise_forward.3} parent=0 // pred_fallthru
    _
  // Predicated region
  $region14: #{rand_noise_forward.3} parent=0 // pred_check
    _
  $region15: #{rand_noise_forward.3} parent=0 // pred_check_branch
    %24 = sbr.rel (0) target = $region17
  $region16: #{rand_noise_forward.3} parent=0 // pred_region
    _
  $region17: #{rand_noise_forward.3} parent=0 // pred_fallthru
    _

</llo_original>
